<compile_context>
chip_gen: v6e
topology: v6e:2x2x1
jax: 0.10.0
libtpu: 0.0.40
codegen_flags: <defaults>
</compile_context>

<pallas_src>
import jax
import jax.numpy as jnp
from jax.experimental import pallas as pl
from jax.experimental.pallas import tpu as pltpu


def _customnet_kernel(p_ref, cw_ref, cb_ref, pool_ref, fcw_ref, fcb_ref, o_ref):
    """Single-invocation kernel (whole problem fits easily in VMEM).

    p_ref    : (M, 128)     im2col patches, 4 spatial positions lane-packed per row
    cw_ref   : (128, 4*Co)  block-diagonal conv1 weights (4 copies of (Kp, Co))
    cb_ref   : (1, 4*Co)    conv1 bias tiled 4x along lanes
    pool_ref : (B, M)       block-row average-pool matrix (entries 1/HW)
    fcw_ref  : (4*Co, Fp)   fc weight, transposed, tiled 4x along K, lane-padded
    fcb_ref  : (1, Fp)      fc bias, lane-padded
    o_ref    : (B, Fp)      output logits (lane-dense)
    """
    # Conv1 as ONE im2col matmul on the MXU; bias + ReLU on the VPU.
    h = jnp.dot(p_ref[...], cw_ref[...], preferred_element_type=jnp.float32)
    h = jnp.maximum(h + cb_ref[...], 0.0)                                # (M, 4*Co)

    # AdaptiveAvgPool2d((1,1)) as a matmul: per-batch row reduction, 1/HW scaled.
    pooled = jnp.dot(pool_ref[...], h, preferred_element_type=jnp.float32)  # (B, 4*Co)

    # FC: fcw tiled 4x along K implicitly folds the 4 lane-packed position groups.
    out = jnp.dot(pooled, fcw_ref[...], preferred_element_type=jnp.float32)
    o_ref[...] = (out + fcb_ref[...]).astype(o_ref.dtype)


def prepare_params(conv_w, conv_b, fc_w, fc_b):
    """One-time parameter layout prep (hoisted out of the per-call path)."""
    Cout, Cin, KH, KW = conv_w.shape
    F = fc_w.shape[0]
    K = KH * KW * Cin                      # 27
    Kp = ((K + 7) // 8) * 8                # 32
    pack = max(1, 128 // Kp)               # 4 spatial positions per 128-lane row
    Fp = ((F + 127) // 128) * 128          # 200 -> 256

    # Conv1 weights: OIHW -> (kh, kw, cin, cout) -> (K, Cout), zero-pad rows to Kp,
    # then block-diagonal replicate for the lane-packed layout: (pack*Kp, pack*Cout).
    cw = jnp.transpose(conv_w, (2, 3, 1, 0)).reshape(K, Cout)
    cw = jnp.pad(cw, ((0, Kp - K), (0, 0)))
    cw_bd = jnp.kron(jnp.eye(pack, dtype=cw.dtype), cw)                 # (128, 4*Co)

    cb4 = jnp.tile(conv_b.reshape(1, Cout), (1, pack))                  # (1, 4*Co)

    # FC weights: (F, Cout) -> (Cout, Fp), lane-padded, tiled pack x along K.
    fcw = jnp.pad(fc_w.T, ((0, 0), (0, Fp - F)))
    fcw4 = jnp.tile(fcw, (pack, 1))                                     # (4*Co, Fp)
    fcb = jnp.pad(fc_b.reshape(1, F), ((0, 0), (0, Fp - F)))            # (1, Fp)

    return {"cw_bd": cw_bd, "cb4": cb4, "fcw4": fcw4, "fcb": fcb}


@jax.jit
def customnet_forward(x_nchw, params):
    """x_nchw: (B, Cin, H, W) float32.  Returns (B, 200) float32."""
    B, Cin, H, W = x_nchw.shape
    HW = H * W
    K = 9 * Cin
    Kp = ((K + 7) // 8) * 8
    L = params["cw_bd"].shape[0]           # 128
    pack = L // Kp
    N4 = params["cw_bd"].shape[1]          # pack * Cout
    Fp = params["fcw4"].shape[1]
    F = 200
    assert HW % pack == 0, "H*W must be divisible by the lane-pack factor"
    M = B * HW // pack

    # ---- activation-side glue (fused with the pallas_call under jit) ----
    x_nhwc = jnp.transpose(x_nchw, (0, 2, 3, 1))                        # (B,H,W,Cin)
    x_pad = jnp.pad(x_nhwc, ((0, 0), (1, 1), (1, 1), (0, 0)))
    # im2col patches, tap order (kh, kw, cin): (B, H, W, 9*Cin)
    patches = jnp.concatenate(
        [x_pad[:, ki:ki + H, kj:kj + W, :] for ki in range(3) for kj in range(3)],
        axis=-1)
    patches = patches.reshape(B, HW, K)
    patches = jnp.pad(patches, ((0, 0), (0, 0), (0, Kp - K)))
    patches = patches.reshape(M, L)        # 4 consecutive spatial positions per row

    # Block-row pooling matrix: row b averages packed rows [b*HW/pack, (b+1)*HW/pack).
    # Built from compile-time constants -> folded by XLA.
    pool_mat = jnp.kron(jnp.eye(B, dtype=jnp.float32),
                        jnp.full((1, HW // pack), 1.0 / HW, dtype=jnp.float32))

    out = pl.pallas_call(
        _customnet_kernel,
        out_shape=jax.ShapeDtypeStruct((B, Fp), jnp.float32),
        grid_spec=pltpu.PrefetchScalarGridSpec(
            num_scalar_prefetch=0,
            grid=(1,),
            in_specs=[
                pl.BlockSpec((M, L), lambda i: (0, 0)),
                pl.BlockSpec((L, N4), lambda i: (0, 0)),
                pl.BlockSpec((1, N4), lambda i: (0, 0)),
                pl.BlockSpec((B, M), lambda i: (0, 0)),
                pl.BlockSpec((N4, Fp), lambda i: (0, 0)),
                pl.BlockSpec((1, Fp), lambda i: (0, 0)),
            ],
            out_specs=pl.BlockSpec((B, Fp), lambda i: (0, 0)),
        ),
        compiler_params=pltpu.CompilerParams(
            dimension_semantics=("arbitrary",)),
    )(patches, params["cw_bd"], params["cb4"], pool_mat,
      params["fcw4"], params["fcb"])

    return out[:, :F]


def _reference_forward(x_nchw, conv_w, conv_b, fc_w, fc_b):
    """Pure-JAX reference matching the PyTorch forward."""
    y = jax.lax.conv_general_dilated(
        x_nchw, conv_w, window_strides=(1, 1), padding=((1, 1), (1, 1)),
        dimension_numbers=("NCHW", "OIHW", "NCHW"),
        precision=jax.lax.Precision.HIGHEST)
    y = jnp.maximum(y + conv_b[None, :, None, None], 0.0)
    y = jnp.mean(y, axis=(2, 3))                 # adaptive avg pool (1,1) + flatten
    return jnp.dot(y, fc_w.T, precision=jax.lax.Precision.HIGHEST) + fc_b[None, :]


if __name__ == "__main__":
    key = jax.random.PRNGKey(0)
    k_x, k_cw, k_cb, k_fw, k_fb = jax.random.split(key, 5)

    B, Cin, H, W = 4, 3, 16, 16
    Cout, F = 64, 200

    x = jax.random.normal(k_x, (B, Cin, H, W), dtype=jnp.float32)

    # Deterministic synthetic parameters (shapes match nn.Conv2d(3,64,3) / nn.Linear(64,200)).
    conv_w = jax.random.normal(k_cw, (Cout, Cin, 3, 3), dtype=jnp.float32) * 0.1
    conv_b = jax.random.normal(k_cb, (Cout,), dtype=jnp.float32) * 0.1
    fc_w = jax.random.normal(k_fw, (F, Cout), dtype=jnp.float32) * 0.1
    fc_b = jax.random.normal(k_fb, (F,), dtype=jnp.float32) * 0.1

    # One-time weight layout prep (init-time, not per-call).
    params = jax.tree.map(jax.block_until_ready,
                          prepare_params(conv_w, conv_b, fc_w, fc_b))

    out = customnet_forward(x, params)
    out = jax.block_until_ready(out)

    ref = _reference_forward(x, conv_w, conv_b, fc_w, fc_b)
    assert out.shape == (B, F)
    assert jnp.allclose(out, ref, atol=1e-3, rtol=1e-3), "mismatch vs reference"

    print("KERNEL_OK")
</pallas_src>

<mosaic_0001>
module attributes {stable_mosaic.version = 11 : i64} {
  func.func @_customnet_kernel(%arg0: i32, %arg1: memref<256x128xf32, #tpu.memory_space<vmem>>, %arg2: memref<128x256xf32, #tpu.memory_space<vmem>>, %arg3: memref<1x256xf32, #tpu.memory_space<vmem>>, %arg4: memref<4x256xf32, #tpu.memory_space<vmem>>, %arg5: memref<256x256xf32, #tpu.memory_space<vmem>>, %arg6: memref<1x256xf32, #tpu.memory_space<vmem>>, %arg7: memref<4x256xf32, #tpu.memory_space<vmem>>) attributes {dimension_semantics = [#tpu.dimension_semantics<arbitrary>], iteration_bounds = array<i64: 1>, scalar_prefetch = 0 : i64, scratch_operands = 0 : i64, tpu.core_type = #tpu.core_type<tc>, window_params = [{pipeline_mode = #tpu.pipeline_mode<synchronous>, transform_indices = @transform_0, window_bounds = array<i64: 256, 128>}, {pipeline_mode = #tpu.pipeline_mode<synchronous>, transform_indices = @transform_1, window_bounds = array<i64: 128, 256>}, {pipeline_mode = #tpu.pipeline_mode<synchronous>, transform_indices = @transform_2, window_bounds = array<i64: 1, 256>}, {pipeline_mode = #tpu.pipeline_mode<synchronous>, transform_indices = @transform_3, window_bounds = array<i64: 4, 256>}, {pipeline_mode = #tpu.pipeline_mode<synchronous>, transform_indices = @transform_4, window_bounds = array<i64: 256, 256>}, {pipeline_mode = #tpu.pipeline_mode<synchronous>, transform_indices = @transform_5, window_bounds = array<i64: 1, 256>}, {pipeline_mode = #tpu.pipeline_mode<synchronous>, transform_indices = @transform_6, window_bounds = array<i64: 4, 256>}]} {
    %c0 = arith.constant 0 : index
    %c0_0 = arith.constant 0 : index
    %0 = vector.load %arg1[%c0, %c0_0] : memref<256x128xf32, #tpu.memory_space<vmem>>, vector<256x128xf32>
    %c0_1 = arith.constant 0 : index
    %c0_2 = arith.constant 0 : index
    %1 = vector.load %arg2[%c0_1, %c0_2] : memref<128x256xf32, #tpu.memory_space<vmem>>, vector<128x256xf32>
    %cst = arith.constant dense<0.000000e+00> : vector<256x256xf32>
    %2 = tpu.matmul %0, %1, %cst {dimension_numbers = #tpu.dot_dimension_numbers<[1], [0], [0], [1], [0, 0, 1, 1], [], []>} : vector<256x128xf32>, vector<128x256xf32>, vector<256x256xf32> -> vector<256x256xf32>
    %c0_3 = arith.constant 0 : index
    %c0_4 = arith.constant 0 : index
    %3 = vector.load %arg3[%c0_3, %c0_4] : memref<1x256xf32, #tpu.memory_space<vmem>>, vector<1x256xf32>
    %4 = vector.broadcast %3 : vector<1x256xf32> to vector<256x256xf32>
    %5 = arith.addf %2, %4 : vector<256x256xf32>
    %cst_5 = arith.constant 0.000000e+00 : f32
    %6 = vector.broadcast %cst_5 : f32 to vector<256x256xf32>
    %7 = arith.maximumf %5, %6 : vector<256x256xf32>
    %c0_6 = arith.constant 0 : index
    %c0_7 = arith.constant 0 : index
    %8 = vector.load %arg4[%c0_6, %c0_7] : memref<4x256xf32, #tpu.memory_space<vmem>>, vector<4x256xf32>
    %cst_8 = arith.constant dense<0.000000e+00> : vector<4x256xf32>
    %9 = tpu.matmul %8, %7, %cst_8 {dimension_numbers = #tpu.dot_dimension_numbers<[1], [0], [0], [1], [0, 0, 1, 1], [], []>} : vector<4x256xf32>, vector<256x256xf32>, vector<4x256xf32> -> vector<4x256xf32>
    %c0_9 = arith.constant 0 : index
    %c0_10 = arith.constant 0 : index
    %10 = vector.load %arg5[%c0_9, %c0_10] : memref<256x256xf32, #tpu.memory_space<vmem>>, vector<256x256xf32>
    %cst_11 = arith.constant dense<0.000000e+00> : vector<4x256xf32>
    %11 = tpu.matmul %9, %10, %cst_11 {dimension_numbers = #tpu.dot_dimension_numbers<[1], [0], [0], [1], [0, 0, 1, 1], [], []>} : vector<4x256xf32>, vector<256x256xf32>, vector<4x256xf32> -> vector<4x256xf32>
    %c0_12 = arith.constant 0 : index
    %c0_13 = arith.constant 0 : index
    %12 = vector.load %arg6[%c0_12, %c0_13] : memref<1x256xf32, #tpu.memory_space<vmem>>, vector<1x256xf32>
    %13 = vector.broadcast %12 : vector<1x256xf32> to vector<4x256xf32>
    %14 = arith.addf %11, %13 : vector<4x256xf32>
    %c0_14 = arith.constant 0 : index
    %c0_15 = arith.constant 0 : index
    %15 = vector.load %arg7[%c0_14, %c0_15] : memref<4x256xf32, #tpu.memory_space<vmem>>, vector<4x256xf32>
    tpu.vector_store %arg7[%c0_14, %c0_15], %14 {strides = array<i32>} : memref<4x256xf32, #tpu.memory_space<vmem>>, vector<4x256xf32>,
    return
  }
  func.func @transform_0(%arg0: i32) -> (i32, i32) {
    %c0_i32 = arith.constant 0 : i32
    %c0_i32_0 = arith.constant 0 : i32
    %c0_i32_1 = arith.constant 0 : i32
    return %c0_i32, %c0_i32_0 : i32, i32
  }
  func.func @transform_1(%arg0: i32) -> (i32, i32) {
    %c0_i32 = arith.constant 0 : i32
    %c0_i32_0 = arith.constant 0 : i32
    %c0_i32_1 = arith.constant 0 : i32
    return %c0_i32, %c0_i32_0 : i32, i32
  }
  func.func @transform_2(%arg0: i32) -> (i32, i32) {
    %c0_i32 = arith.constant 0 : i32
    %c0_i32_0 = arith.constant 0 : i32
    %c0_i32_1 = arith.constant 0 : i32
    return %c0_i32, %c0_i32_0 : i32, i32
  }
  func.func @transform_3(%arg0: i32) -> (i32, i32) {
    %c0_i32 = arith.constant 0 : i32
    %c0_i32_0 = arith.constant 0 : i32
    %c0_i32_1 = arith.constant 0 : i32
    return %c0_i32, %c0_i32_0 : i32, i32
  }
  func.func @transform_4(%arg0: i32) -> (i32, i32) {
    %c0_i32 = arith.constant 0 : i32
    %c0_i32_0 = arith.constant 0 : i32
    %c0_i32_1 = arith.constant 0 : i32
    return %c0_i32, %c0_i32_0 : i32, i32
  }
  func.func @transform_5(%arg0: i32) -> (i32, i32) {
    %c0_i32 = arith.constant 0 : i32
    %c0_i32_0 = arith.constant 0 : i32
    %c0_i32_1 = arith.constant 0 : i32
    return %c0_i32, %c0_i32_0 : i32, i32
  }
  func.func @transform_6(%arg0: i32) -> (i32, i32) {
    %c0_i32 = arith.constant 0 : i32
    %c0_i32_0 = arith.constant 0 : i32
    %c0_i32_1 = arith.constant 0 : i32
    return %c0_i32, %c0_i32_0 : i32, i32
  }
}

</mosaic_0001>

<llo_original>
// kernel: customnet_forward.1
$region0: #{customnet_forward.1}
  #allocation0 [shape = 'u32[]', space=smem, size = 0x4, offset = 0x4, fixed_abs, tag = 'smem constant byte address 0x4 - core index']
  #allocation1 [shape = 'u32[144,128]{1,0:T(1,128)}', space=vmem, size = 0x12000, scoped, tag = 'internal scratch']
  %s0 = inlined_call_operand.vmem [shape: f32[256,128], index: 0, kind: input, shape index: {}]
  %s1 = inlined_call_operand.vmem [shape: f32[128,256], index: 1, kind: input, shape index: {}]
  %s2 = inlined_call_operand.vmem [shape: f32[1,256], index: 2, kind: input, shape index: {}]
  %s3 = inlined_call_operand.vmem [shape: f32[4,256], index: 3, kind: input, shape index: {}]
  %s4 = inlined_call_operand.vmem [shape: f32[256,256], index: 4, kind: input, shape index: {}]
  %s5 = inlined_call_operand.vmem [shape: f32[1,256], index: 5, kind: input, shape index: {}]
  %s6 = inlined_call_operand.hbm [shape: f32[4,256], index: 6, kind: output, shape index: {}]
  %s7 = sld [smem:[#allocation0]]
  $region34: #{customnet_forward.1} parent=0
    _
  %s9 = ssub.s32 1, %s7
  %s10 = scalar_select 0, %s9, %s7
  $region1: #{customnet_forward.1} parent=0
    #allocation2 [shape = 'u8[4096]{0}', space=vmem, size = 0x1000, scoped, tag = 'output window, operand 0, single buffered']
    #allocation3 [shape = 's32[1]{0}', space=sflag, size = 0x4, scoped, tag = 'scoped memory for customnet_forward.1']
    %11 = vsyncpa [#allocation3], 0
    // Predicated region
    $region2: #{customnet_forward.1} parent=1 // pred_check
      _
    $region3: #{customnet_forward.1} parent=1 // pred_check_branch
      %13 = sbr.rel (0) target = $region5
    $region4: #{customnet_forward.1} parent=1 // pred_region
      _
    $region5: #{customnet_forward.1} parent=1 // pred_fallthru
      _
    // Predicated region
    $region6: #{customnet_forward.1} parent=1 // pred_check
      _
    $region7: #{customnet_forward.1} parent=1 // pred_check_branch
      %15 = sbr.rel (0) target = $region9
    $region8: #{customnet_forward.1} parent=1 // pred_region
      _
    $region9: #{customnet_forward.1} parent=1 // pred_fallthru
      _
    // Predicated region
    $region10: #{customnet_forward.1} parent=1 // pred_check
      _
    $region11: #{customnet_forward.1} parent=1 // pred_check_branch
      %17 = sbr.rel (0) target = $region13
    $region12: #{customnet_forward.1} parent=1 // pred_region
      _
    $region13: #{customnet_forward.1} parent=1 // pred_fallthru
      _
    // Predicated region
    $region14: #{customnet_forward.1} parent=1 // pred_check
      _
    $region15: #{customnet_forward.1} parent=1 // pred_check_branch
      %19 = sbr.rel (0) target = $region17
    $region16: #{customnet_forward.1} parent=1 // pred_region
      _
    $region17: #{customnet_forward.1} parent=1 // pred_fallthru
      _
    // Predicated region
    $region18: #{customnet_forward.1} parent=1 // pred_check
      _
    $region19: #{customnet_forward.1} parent=1 // pred_check_branch
      %21 = sbr.rel (0) target = $region21
    $region20: #{customnet_forward.1} parent=1 // pred_region
      _
    $region21: #{customnet_forward.1} parent=1 // pred_fallthru
      _
    // Predicated region
    $region22: #{customnet_forward.1} parent=1 // pred_check
      _
    $region23: #{customnet_forward.1} parent=1 // pred_check_branch
      %23 = sbr.rel (0) target = $region25
    $region24: #{customnet_forward.1} parent=1 // pred_region
      _
    $region25: #{customnet_forward.1} parent=1 // pred_fallthru
      _
    %v24 = vld [vmem:[%s0] sm:$0xff]
    %v25 = vld [vmem:[%s0 + $0x8] sm:$0xff]
    %v26 = vld [vmem:[%s0 + $0x10] sm:$0xff]
    %v27 = vld [vmem:[%s0 + $0x18] sm:$0xff]
    %v28 = vld [vmem:[%s0 + $0x20] sm:$0xff]
    %v29 = vld [vmem:[%s0 + $0x28] sm:$0xff]
    %v30 = vld [vmem:[%s0 + $0x30] sm:$0xff]
    %v31 = vld [vmem:[%s0 + $0x38] sm:$0xff]
    %v32 = vld [vmem:[%s0 + $0x40] sm:$0xff]
    %v33 = vld [vmem:[%s0 + $0x48] sm:$0xff]
    %v34 = vld [vmem:[%s0 + $0x50] sm:$0xff]
    %v35 = vld [vmem:[%s0 + $0x58] sm:$0xff]
    %v36 = vld [vmem:[%s0 + $0x60] sm:$0xff]
    %v37 = vld [vmem:[%s0 + $0x68] sm:$0xff]
    %v38 = vld [vmem:[%s0 + $0x70] sm:$0xff]
    %v39 = vld [vmem:[%s0 + $0x78] sm:$0xff]
    %v40 = vld [vmem:[%s0 + $0x80] sm:$0xff]
    %v41 = vld [vmem:[%s0 + $0x88] sm:$0xff]
    %v42 = vld [vmem:[%s0 + $0x90] sm:$0xff]
    %v43 = vld [vmem:[%s0 + $0x98] sm:$0xff]
    %v44 = vld [vmem:[%s0 + $0xa0] sm:$0xff]
    %v45 = vld [vmem:[%s0 + $0xa8] sm:$0xff]
    %v46 = vld [vmem:[%s0 + $0xb0] sm:$0xff]
    %v47 = vld [vmem:[%s0 + $0xb8] sm:$0xff]
    %v48 = vld [vmem:[%s0 + $0xc0] sm:$0xff]
    %v49 = vld [vmem:[%s0 + $0xc8] sm:$0xff]
    %v50 = vld [vmem:[%s0 + $0xd0] sm:$0xff]
    %v51 = vld [vmem:[%s0 + $0xd8] sm:$0xff]
    %v52 = vld [vmem:[%s0 + $0xe0] sm:$0xff]
    %v53 = vld [vmem:[%s0 + $0xe8] sm:$0xff]
    %v54 = vld [vmem:[%s0 + $0xf0] sm:$0xff]
    %v55 = vld [vmem:[%s0 + $0xf8] sm:$0xff]
    %v56 = vld [vmem:[%s1] sm:$0xff]
    %v57 = vld [vmem:[%s1 + $0x8] sm:$0xff]
    %v58 = vld [vmem:[%s1 + $0x10] sm:$0xff]
    %v59 = vld [vmem:[%s1 + $0x18] sm:$0xff]
    %v60 = vld [vmem:[%s1 + $0x20] sm:$0xff]
    %v61 = vld [vmem:[%s1 + $0x28] sm:$0xff]
    %v62 = vld [vmem:[%s1 + $0x30] sm:$0xff]
    %v63 = vld [vmem:[%s1 + $0x38] sm:$0xff]
    %v64 = vld [vmem:[%s1 + $0x40] sm:$0xff]
    %v65 = vld [vmem:[%s1 + $0x48] sm:$0xff]
    %v66 = vld [vmem:[%s1 + $0x50] sm:$0xff]
    %v67 = vld [vmem:[%s1 + $0x58] sm:$0xff]
    %v68 = vld [vmem:[%s1 + $0x60] sm:$0xff]
    %v69 = vld [vmem:[%s1 + $0x68] sm:$0xff]
    %v70 = vld [vmem:[%s1 + $0x70] sm:$0xff]
    %v71 = vld [vmem:[%s1 + $0x78] sm:$0xff]
    %v72 = vld [vmem:[%s1 + $0x80] sm:$0xff]
    %v73 = vld [vmem:[%s1 + $0x88] sm:$0xff]
    %v74 = vld [vmem:[%s1 + $0x90] sm:$0xff]
    %v75 = vld [vmem:[%s1 + $0x98] sm:$0xff]
    %v76 = vld [vmem:[%s1 + $0xa0] sm:$0xff]
    %v77 = vld [vmem:[%s1 + $0xa8] sm:$0xff]
    %v78 = vld [vmem:[%s1 + $0xb0] sm:$0xff]
    %v79 = vld [vmem:[%s1 + $0xb8] sm:$0xff]
    %v80 = vld [vmem:[%s1 + $0xc0] sm:$0xff]
    %v81 = vld [vmem:[%s1 + $0xc8] sm:$0xff]
    %v82 = vld [vmem:[%s1 + $0xd0] sm:$0xff]
    %v83 = vld [vmem:[%s1 + $0xd8] sm:$0xff]
    %v84 = vld [vmem:[%s1 + $0xe0] sm:$0xff]
    %v85 = vld [vmem:[%s1 + $0xe8] sm:$0xff]
    %v86 = vld [vmem:[%s1 + $0xf0] sm:$0xff]
    %v87 = vld [vmem:[%s1 + $0xf8] sm:$0xff]
    %v88 = vld [vmem:[%s2] sm:$0x3]
    %v90 = vlaneseq
    %v91 = vshrl.u32 %v90, 7
    %v92 = vsub.s32 0, %v91
    %v93 = vrot.slane %v88, %v92
    %v94 = vlaneseq
    %v95 = vshrl.u32 %v94, 7
    %v96 = vsub.s32 1, %v95
    %v97 = vrot.slane %v88, %v96
    %100 = vmatprep.subr.mxu0 %v87
    %101 = vmatpush1.msra.mxu0 %v86
    %102 = vmatprep.subr.mxu0 %v85
    %103 = vmatpush1.msra.mxu0 %v84
    %104 = vmatprep.subr.mxu0 %v83
    %105 = vmatpush1.msra.mxu0 %v82
    %106 = vmatprep.subr.mxu0 %v81
    %107 = vmatpush1.msra.mxu0 %v80
    %108 = vmatprep.subr.mxu0 %v79
    %109 = vmatpush1.msra.mxu0 %v78
    %110 = vmatprep.subr.mxu0 %v77
    %111 = vmatpush1.msra.mxu0 %v76
    %112 = vmatprep.subr.mxu0 %v75
    %113 = vmatpush1.msra.mxu0 %v74
    %114 = vmatprep.subr.mxu0 %v73
    %115 = vmatpush1.msra.mxu0 %v72
    %116 = vmatprep.subr.mxu0 %v71
    %117 = vmatpush1.msra.mxu0 %v70
    %118 = vmatprep.subr.mxu0 %v69
    %119 = vmatpush1.msra.mxu0 %v68
    %120 = vmatprep.subr.mxu0 %v67
    %121 = vmatpush1.msra.mxu0 %v66
    %122 = vmatprep.subr.mxu0 %v65
    %123 = vmatpush1.msra.mxu0 %v64
    %124 = vmatprep.subr.mxu0 %v63
    %125 = vmatpush1.msra.mxu0 %v62
    %126 = vmatprep.subr.mxu0 %v61
    %127 = vmatpush1.msra.mxu0 %v60
    %128 = vmatprep.subr.mxu0 %v59
    %129 = vmatpush1.msra.mxu0 %v58
    %130 = vmatprep.subr.mxu0 %v57
    %131 = vmatpush1.msra.mxu0 %v56
    %132 = vmatprep.subr.mxu0 0.0
    %133 = vmatpush2.msra.mxu0 0.0
    %134 = vmatprep.subr.mxu0 0.0
    %135 = vmatpush2.msra.mxu0 0.0
    %136 = vmatprep.subr.mxu0 0.0
    %137 = vmatpush2.msra.mxu0 0.0
    %138 = vmatprep.subr.mxu0 0.0
    %139 = vmatpush2.msra.mxu0 0.0
    %140 = vmatprep.subr.mxu0 0.0
    %141 = vmatpush2.msra.mxu0 0.0
    %142 = vmatprep.subr.mxu0 0.0
    %143 = vmatpush2.msra.mxu0 0.0
    %144 = vmatprep.subr.mxu0 0.0
    %145 = vmatpush2.msra.mxu0 0.0
    %146 = vmatprep.subr.mxu0 0.0
    %147 = vmatpush2.msra.mxu0 0.0
    %148 = vmatprep.subr.mxu0 0.0
    %149 = vmatpush2.msra.mxu0 0.0
    %150 = vmatprep.subr.mxu0 0.0
    %151 = vmatpush2.msra.mxu0 0.0
    %152 = vmatprep.subr.mxu0 0.0
    %153 = vmatpush2.msra.mxu0 0.0
    %154 = vmatprep.subr.mxu0 0.0
    %155 = vmatpush2.msra.mxu0 0.0
    %156 = vmatprep.subr.mxu0 0.0
    %157 = vmatpush2.msra.mxu0 0.0
    %158 = vmatprep.subr.mxu0 0.0
    %159 = vmatpush2.msra.mxu0 0.0
    %160 = vmatprep.subr.mxu0 0.0
    %161 = vmatpush2.msra.mxu0 0.0
    %162 = vmatprep.subr.mxu0 0.0
    %163 = vmatpush2.msra.mxu0 0.0
    %164 = vmatprep.mubr.f32.mxu0 0.0
    %165 = vmatmul.mubr.f32.gmra.mxu0 %v24
    %v166 = vpop.f32.mrf.mxu0
    %v167 = vadd.f32 %v93, %v166
    %v168 = vpop.f32.mrf.mxu0
    %v169 = vadd.f32 %v97, %v168
    %170 = vmatprep.mubr.f32.mxu0 0.0
    %171 = vmatmul.mubr.f32.gmra.mxu0 %v25
    %v172 = vpop.f32.mrf.mxu0
    %v173 = vadd.f32 %v93, %v172
    %v174 = vpop.f32.mrf.mxu0
    %v175 = vadd.f32 %v97, %v174
    %176 = vmatprep.mubr.f32.mxu0 0.0
    %177 = vmatmul.mubr.f32.gmra.mxu0 %v26
    %v178 = vpop.f32.mrf.mxu0
    %v179 = vadd.f32 %v93, %v178
    %v180 = vpop.f32.mrf.mxu0
    %v181 = vadd.f32 %v97, %v180
    %182 = vmatprep.mubr.f32.mxu0 0.0
    %183 = vmatmul.mubr.f32.gmra.mxu0 %v27
    %v184 = vpop.f32.mrf.mxu0
    %v185 = vadd.f32 %v93, %v184
    %v186 = vpop.f32.mrf.mxu0
    %v187 = vadd.f32 %v97, %v186
    %188 = vmatprep.mubr.f32.mxu0 0.0
    %189 = vmatmul.mubr.f32.gmra.mxu0 %v28
    %v190 = vpop.f32.mrf.mxu0
    %v191 = vadd.f32 %v93, %v190
    %v192 = vpop.f32.mrf.mxu0
    %v193 = vadd.f32 %v97, %v192
    %194 = vmatprep.mubr.f32.mxu0 0.0
    %195 = vmatmul.mubr.f32.gmra.mxu0 %v29
    %v196 = vpop.f32.mrf.mxu0
    %v197 = vadd.f32 %v93, %v196
    %v198 = vpop.f32.mrf.mxu0
    %v199 = vadd.f32 %v97, %v198
    %200 = vmatprep.mubr.f32.mxu0 0.0
    %201 = vmatmul.mubr.f32.gmra.mxu0 %v30
    %v202 = vpop.f32.mrf.mxu0
    %v203 = vadd.f32 %v93, %v202
    %v204 = vpop.f32.mrf.mxu0
    %v205 = vadd.f32 %v97, %v204
    %206 = vmatprep.mubr.f32.mxu0 0.0
    %207 = vmatmul.mubr.f32.gmra.mxu0 %v31
    %v208 = vpop.f32.mrf.mxu0
    %v209 = vadd.f32 %v93, %v208
    %v210 = vpop.f32.mrf.mxu0
    %v211 = vadd.f32 %v97, %v210
    %212 = vmatprep.mubr.f32.mxu0 0.0
    %213 = vmatmul.mubr.f32.gmra.mxu0 %v32
    %v214 = vpop.f32.mrf.mxu0
    %v215 = vadd.f32 %v93, %v214
    %v216 = vpop.f32.mrf.mxu0
    %v217 = vadd.f32 %v97, %v216
    %218 = vmatprep.mubr.f32.mxu0 0.0
    %219 = vmatmul.mubr.f32.gmra.mxu0 %v33
    %v220 = vpop.f32.mrf.mxu0
    %v221 = vadd.f32 %v93, %v220
    %v222 = vpop.f32.mrf.mxu0
    %v223 = vadd.f32 %v97, %v222
    %224 = vmatprep.mubr.f32.mxu0 0.0
    %225 = vmatmul.mubr.f32.gmra.mxu0 %v34
    %v226 = vpop.f32.mrf.mxu0
    %v227 = vadd.f32 %v93, %v226
    %v228 = vpop.f32.mrf.mxu0
    %v229 = vadd.f32 %v97, %v228
    %230 = vmatprep.mubr.f32.mxu0 0.0
    %231 = vmatmul.mubr.f32.gmra.mxu0 %v35
    %v232 = vpop.f32.mrf.mxu0
    %v233 = vadd.f32 %v93, %v232
    %v234 = vpop.f32.mrf.mxu0
    %v235 = vadd.f32 %v97, %v234
    %236 = vmatprep.mubr.f32.mxu0 0.0
    %237 = vmatmul.mubr.f32.gmra.mxu0 %v36
    %v238 = vpop.f32.mrf.mxu0
    %v239 = vadd.f32 %v93, %v238
    %v240 = vpop.f32.mrf.mxu0
    %v241 = vadd.f32 %v97, %v240
    %242 = vmatprep.mubr.f32.mxu0 0.0
    %243 = vmatmul.mubr.f32.gmra.mxu0 %v37
    %v244 = vpop.f32.mrf.mxu0
    %v245 = vadd.f32 %v93, %v244
    %v246 = vpop.f32.mrf.mxu0
    %v247 = vadd.f32 %v97, %v246
    %248 = vmatprep.mubr.f32.mxu0 0.0
    %249 = vmatmul.mubr.f32.gmra.mxu0 %v38
    %v250 = vpop.f32.mrf.mxu0
    %v251 = vadd.f32 %v93, %v250
    %v252 = vpop.f32.mrf.mxu0
    %v253 = vadd.f32 %v97, %v252
    %254 = vmatprep.mubr.f32.mxu0 0.0
    %255 = vmatmul.mubr.f32.gmra.mxu0 %v39
    %v256 = vpop.f32.mrf.mxu0
    %v257 = vadd.f32 %v93, %v256
    %v258 = vpop.f32.mrf.mxu0
    %v259 = vadd.f32 %v97, %v258
    %260 = vmatprep.mubr.f32.mxu0 0.0
    %261 = vmatmul.mubr.f32.gmra.mxu0 %v40
    %v262 = vpop.f32.mrf.mxu0
    %v263 = vadd.f32 %v93, %v262
    %v264 = vpop.f32.mrf.mxu0
    %v265 = vadd.f32 %v97, %v264
    %266 = vmatprep.mubr.f32.mxu0 0.0
    %267 = vmatmul.mubr.f32.gmra.mxu0 %v41
    %v268 = vpop.f32.mrf.mxu0
    %v269 = vadd.f32 %v93, %v268
    %v270 = vpop.f32.mrf.mxu0
    %v271 = vadd.f32 %v97, %v270
    %272 = vmatprep.mubr.f32.mxu0 0.0
    %273 = vmatmul.mubr.f32.gmra.mxu0 %v42
    %v274 = vpop.f32.mrf.mxu0
    %v275 = vadd.f32 %v93, %v274
    %v276 = vpop.f32.mrf.mxu0
    %v277 = vadd.f32 %v97, %v276
    %278 = vmatprep.mubr.f32.mxu0 0.0
    %279 = vmatmul.mubr.f32.gmra.mxu0 %v43
    %v280 = vpop.f32.mrf.mxu0
    %v281 = vadd.f32 %v93, %v280
    %v282 = vpop.f32.mrf.mxu0
    %v283 = vadd.f32 %v97, %v282
    %284 = vmatprep.mubr.f32.mxu0 0.0
    %285 = vmatmul.mubr.f32.gmra.mxu0 %v44
    %v286 = vpop.f32.mrf.mxu0
    %v287 = vadd.f32 %v93, %v286
    %v288 = vpop.f32.mrf.mxu0
    %v289 = vadd.f32 %v97, %v288
    %290 = vmatprep.mubr.f32.mxu0 0.0
    %291 = vmatmul.mubr.f32.gmra.mxu0 %v45
    %v292 = vpop.f32.mrf.mxu0
    %v293 = vadd.f32 %v93, %v292
    %v294 = vpop.f32.mrf.mxu0
    %v295 = vadd.f32 %v97, %v294
    %296 = vmatprep.mubr.f32.mxu0 0.0
    %297 = vmatmul.mubr.f32.gmra.mxu0 %v46
    %v298 = vpop.f32.mrf.mxu0
    %v299 = vadd.f32 %v93, %v298
    %v300 = vpop.f32.mrf.mxu0
    %v301 = vadd.f32 %v97, %v300
    %302 = vmatprep.mubr.f32.mxu0 0.0
    %303 = vmatmul.mubr.f32.gmra.mxu0 %v47
    %v304 = vpop.f32.mrf.mxu0
    %v305 = vadd.f32 %v93, %v304
    %v306 = vpop.f32.mrf.mxu0
    %v307 = vadd.f32 %v97, %v306
    %308 = vmatprep.mubr.f32.mxu0 0.0
    %309 = vmatmul.mubr.f32.gmra.mxu0 %v48
    %v310 = vpop.f32.mrf.mxu0
    %v311 = vadd.f32 %v93, %v310
    %v312 = vpop.f32.mrf.mxu0
    %v313 = vadd.f32 %v97, %v312
    %314 = vmatprep.mubr.f32.mxu0 0.0
    %315 = vmatmul.mubr.f32.gmra.mxu0 %v49
    %v316 = vpop.f32.mrf.mxu0
    %v317 = vadd.f32 %v93, %v316
    %v318 = vpop.f32.mrf.mxu0
    %v319 = vadd.f32 %v97, %v318
    %320 = vmatprep.mubr.f32.mxu0 0.0
    %321 = vmatmul.mubr.f32.gmra.mxu0 %v50
    %v322 = vpop.f32.mrf.mxu0
    %v323 = vadd.f32 %v93, %v322
    %v324 = vpop.f32.mrf.mxu0
    %v325 = vadd.f32 %v97, %v324
    %326 = vmatprep.mubr.f32.mxu0 0.0
    %327 = vmatmul.mubr.f32.gmra.mxu0 %v51
    %v328 = vpop.f32.mrf.mxu0
    %v329 = vadd.f32 %v93, %v328
    %v330 = vpop.f32.mrf.mxu0
    %v331 = vadd.f32 %v97, %v330
    %332 = vmatprep.mubr.f32.mxu0 0.0
    %333 = vmatmul.mubr.f32.gmra.mxu0 %v52
    %v334 = vpop.f32.mrf.mxu0
    %v335 = vadd.f32 %v93, %v334
    %v336 = vpop.f32.mrf.mxu0
    %v337 = vadd.f32 %v97, %v336
    %338 = vmatprep.mubr.f32.mxu0 0.0
    %339 = vmatmul.mubr.f32.gmra.mxu0 %v53
    %v340 = vpop.f32.mrf.mxu0
    %v341 = vadd.f32 %v93, %v340
    %v342 = vpop.f32.mrf.mxu0
    %v343 = vadd.f32 %v97, %v342
    %344 = vmatprep.mubr.f32.mxu0 0.0
    %345 = vmatmul.mubr.f32.gmra.mxu0 %v54
    %v346 = vpop.f32.mrf.mxu0
    %v347 = vadd.f32 %v93, %v346
    %v348 = vpop.f32.mrf.mxu0
    %v349 = vadd.f32 %v97, %v348
    %350 = vmatprep.mubr.f32.mxu0 0.0
    %351 = vmatmul.mubr.f32.gmra.mxu0 %v55
    %v352 = vpop.f32.mrf.mxu0
    %v353 = vadd.f32 %v93, %v352
    %v354 = vpop.f32.mrf.mxu0
    %v355 = vadd.f32 %v97, %v354
    %356 = vdwg.mxu0
    %v357 = vmax.f32 %v167, 0.0
    %v358 = vmax.f32 %v169, 0.0
    %v359 = vmax.f32 %v173, 0.0
    %v360 = vmax.f32 %v175, 0.0
    %v361 = vmax.f32 %v179, 0.0
    %v362 = vmax.f32 %v181, 0.0
    %v363 = vmax.f32 %v185, 0.0
    %v364 = vmax.f32 %v187, 0.0
    %v365 = vmax.f32 %v191, 0.0
    %v366 = vmax.f32 %v193, 0.0
    %v367 = vmax.f32 %v197, 0.0
    %v368 = vmax.f32 %v199, 0.0
    %v369 = vmax.f32 %v203, 0.0
    %v370 = vmax.f32 %v205, 0.0
    %v371 = vmax.f32 %v209, 0.0
    %v372 = vmax.f32 %v211, 0.0
    %v373 = vmax.f32 %v215, 0.0
    %v374 = vmax.f32 %v217, 0.0
    %v375 = vmax.f32 %v221, 0.0
    %v376 = vmax.f32 %v223, 0.0
    %v377 = vmax.f32 %v227, 0.0
    %v378 = vmax.f32 %v229, 0.0
    %v379 = vmax.f32 %v233, 0.0
    %v380 = vmax.f32 %v235, 0.0
    %v381 = vmax.f32 %v239, 0.0
    %v382 = vmax.f32 %v241, 0.0
    %v383 = vmax.f32 %v245, 0.0
    %v384 = vmax.f32 %v247, 0.0
    %v385 = vmax.f32 %v251, 0.0
    %v386 = vmax.f32 %v253, 0.0
    %v387 = vmax.f32 %v257, 0.0
    %v388 = vmax.f32 %v259, 0.0
    %v389 = vmax.f32 %v263, 0.0
    %v390 = vmax.f32 %v265, 0.0
    %v391 = vmax.f32 %v269, 0.0
    %v392 = vmax.f32 %v271, 0.0
    %v393 = vmax.f32 %v275, 0.0
    %v394 = vmax.f32 %v277, 0.0
    %v395 = vmax.f32 %v281, 0.0
    %v396 = vmax.f32 %v283, 0.0
    %v397 = vmax.f32 %v287, 0.0
    %v398 = vmax.f32 %v289, 0.0
    %v399 = vmax.f32 %v293, 0.0
    %v400 = vmax.f32 %v295, 0.0
    %v401 = vmax.f32 %v299, 0.0
    %v402 = vmax.f32 %v301, 0.0
    %v403 = vmax.f32 %v305, 0.0
    %v404 = vmax.f32 %v307, 0.0
    %v405 = vmax.f32 %v311, 0.0
    %v406 = vmax.f32 %v313, 0.0
    %v407 = vmax.f32 %v317, 0.0
    %v408 = vmax.f32 %v319, 0.0
    %v409 = vmax.f32 %v323, 0.0
    %v410 = vmax.f32 %v325, 0.0
    %v411 = vmax.f32 %v329, 0.0
    %v412 = vmax.f32 %v331, 0.0
    %v413 = vmax.f32 %v335, 0.0
    %v414 = vmax.f32 %v337, 0.0
    %v415 = vmax.f32 %v341, 0.0
    %v416 = vmax.f32 %v343, 0.0
    %v417 = vmax.f32 %v347, 0.0
    %v418 = vmax.f32 %v349, 0.0
    %v419 = vmax.f32 %v353, 0.0
    %v420 = vmax.f32 %v355, 0.0
    %v421 = vld [vmem:[%s3] sm:$0xff]
    %v423 = vcombine.high %v421, %v421
    %425 = vmatprep.subr.mxu0 %v388
    %426 = vmatpush1.msra.mxu0 %v387
    %427 = vmatprep.subr.mxu0 %v386
    %428 = vmatpush1.msra.mxu0 %v385
    %429 = vmatprep.subr.mxu0 %v384
    %430 = vmatpush1.msra.mxu0 %v383
    %431 = vmatprep.subr.mxu0 %v382
    %432 = vmatpush1.msra.mxu0 %v381
    %433 = vmatprep.subr.mxu0 %v380
    %434 = vmatpush1.msra.mxu0 %v379
    %435 = vmatprep.subr.mxu0 %v378
    %436 = vmatpush1.msra.mxu0 %v377
    %437 = vmatprep.subr.mxu0 %v376
    %438 = vmatpush1.msra.mxu0 %v375
    %439 = vmatprep.subr.mxu0 %v374
    %440 = vmatpush1.msra.mxu0 %v373
    %441 = vmatprep.subr.mxu0 %v372
    %442 = vmatpush1.msra.mxu0 %v371
    %443 = vmatprep.subr.mxu0 %v370
    %444 = vmatpush1.msra.mxu0 %v369
    %445 = vmatprep.subr.mxu0 %v368
    %446 = vmatpush1.msra.mxu0 %v367
    %447 = vmatprep.subr.mxu0 %v366
    %448 = vmatpush1.msra.mxu0 %v365
    %449 = vmatprep.subr.mxu0 %v364
    %450 = vmatpush1.msra.mxu0 %v363
    %451 = vmatprep.subr.mxu0 %v362
    %452 = vmatpush1.msra.mxu0 %v361
    %453 = vmatprep.subr.mxu0 %v360
    %454 = vmatpush1.msra.mxu0 %v359
    %455 = vmatprep.subr.mxu0 %v358
    %456 = vmatpush1.msra.mxu0 %v357
    %457 = vmatprep.subr.mxu0 %v420
    %458 = vmatpush2.msra.mxu0 %v419
    %459 = vmatprep.subr.mxu0 %v418
    %460 = vmatpush2.msra.mxu0 %v417
    %461 = vmatprep.subr.mxu0 %v416
    %462 = vmatpush2.msra.mxu0 %v415
    %463 = vmatprep.subr.mxu0 %v414
    %464 = vmatpush2.msra.mxu0 %v413
    %465 = vmatprep.subr.mxu0 %v412
    %466 = vmatpush2.msra.mxu0 %v411
    %467 = vmatprep.subr.mxu0 %v410
    %468 = vmatpush2.msra.mxu0 %v409
    %469 = vmatprep.subr.mxu0 %v408
    %470 = vmatpush2.msra.mxu0 %v407
    %471 = vmatprep.subr.mxu0 %v406
    %472 = vmatpush2.msra.mxu0 %v405
    %473 = vmatprep.subr.mxu0 %v404
    %474 = vmatpush2.msra.mxu0 %v403
    %475 = vmatprep.subr.mxu0 %v402
    %476 = vmatpush2.msra.mxu0 %v401
    %477 = vmatprep.subr.mxu0 %v400
    %478 = vmatpush2.msra.mxu0 %v399
    %479 = vmatprep.subr.mxu0 %v398
    %480 = vmatpush2.msra.mxu0 %v397
    %481 = vmatprep.subr.mxu0 %v396
    %482 = vmatpush2.msra.mxu0 %v395
    %483 = vmatprep.subr.mxu0 %v394
    %484 = vmatpush2.msra.mxu0 %v393
    %485 = vmatprep.subr.mxu0 %v392
    %486 = vmatpush2.msra.mxu0 %v391
    %487 = vmatprep.subr.mxu0 %v390
    %488 = vmatpush2.msra.mxu0 %v389
    %489 = vmatprep.mubr.f32.mxu0 %v423
    %490 = vmatmul.mubr.f32.gmra.mxu0 %v421
    %v491 = vpop.f32.mrf.mxu0
    %v492 = vadd.f32 0.0, %v491
    %v493 = vpop.f32.mrf.mxu0
    %v494 = vadd.f32 0.0, %v493
    %495 = vdwg.mxu0
    %v496 = vld [vmem:[%s4] sm:$0xff]
    %v497 = vld [vmem:[%s4 + $0x8] sm:$0xff]
    %v498 = vld [vmem:[%s4 + $0x10] sm:$0xff]
    %v499 = vld [vmem:[%s4 + $0x18] sm:$0xff]
    %v500 = vld [vmem:[%s4 + $0x20] sm:$0xff]
    %v501 = vld [vmem:[%s4 + $0x28] sm:$0xff]
    %v502 = vld [vmem:[%s4 + $0x30] sm:$0xff]
    %v503 = vld [vmem:[%s4 + $0x38] sm:$0xff]
    %v504 = vld [vmem:[%s4 + $0x40] sm:$0xff]
    %v505 = vld [vmem:[%s4 + $0x48] sm:$0xff]
    %v506 = vld [vmem:[%s4 + $0x50] sm:$0xff]
    %v507 = vld [vmem:[%s4 + $0x58] sm:$0xff]
    %v508 = vld [vmem:[%s4 + $0x60] sm:$0xff]
    %v509 = vld [vmem:[%s4 + $0x68] sm:$0xff]
    %v510 = vld [vmem:[%s4 + $0x70] sm:$0xff]
    %v511 = vld [vmem:[%s4 + $0x78] sm:$0xff]
    %v512 = vld [vmem:[%s4 + $0x80] sm:$0xff]
    %v513 = vld [vmem:[%s4 + $0x88] sm:$0xff]
    %v514 = vld [vmem:[%s4 + $0x90] sm:$0xff]
    %v515 = vld [vmem:[%s4 + $0x98] sm:$0xff]
    %v516 = vld [vmem:[%s4 + $0xa0] sm:$0xff]
    %v517 = vld [vmem:[%s4 + $0xa8] sm:$0xff]
    %v518 = vld [vmem:[%s4 + $0xb0] sm:$0xff]
    %v519 = vld [vmem:[%s4 + $0xb8] sm:$0xff]
    %v520 = vld [vmem:[%s4 + $0xc0] sm:$0xff]
    %v521 = vld [vmem:[%s4 + $0xc8] sm:$0xff]
    %v522 = vld [vmem:[%s4 + $0xd0] sm:$0xff]
    %v523 = vld [vmem:[%s4 + $0xd8] sm:$0xff]
    %v524 = vld [vmem:[%s4 + $0xe0] sm:$0xff]
    %v525 = vld [vmem:[%s4 + $0xe8] sm:$0xff]
    %v526 = vld [vmem:[%s4 + $0xf0] sm:$0xff]
    %v527 = vld [vmem:[%s4 + $0xf8] sm:$0xff]
    %v528 = vld [vmem:[%s4 + $0x100] sm:$0xff]
    %v529 = vld [vmem:[%s4 + $0x108] sm:$0xff]
    %v530 = vld [vmem:[%s4 + $0x110] sm:$0xff]
    %v531 = vld [vmem:[%s4 + $0x118] sm:$0xff]
    %v532 = vld [vmem:[%s4 + $0x120] sm:$0xff]
    %v533 = vld [vmem:[%s4 + $0x128] sm:$0xff]
    %v534 = vld [vmem:[%s4 + $0x130] sm:$0xff]
    %v535 = vld [vmem:[%s4 + $0x138] sm:$0xff]
    %v536 = vld [vmem:[%s4 + $0x140] sm:$0xff]
    %v537 = vld [vmem:[%s4 + $0x148] sm:$0xff]
    %v538 = vld [vmem:[%s4 + $0x150] sm:$0xff]
    %v539 = vld [vmem:[%s4 + $0x158] sm:$0xff]
    %v540 = vld [vmem:[%s4 + $0x160] sm:$0xff]
    %v541 = vld [vmem:[%s4 + $0x168] sm:$0xff]
    %v542 = vld [vmem:[%s4 + $0x170] sm:$0xff]
    %v543 = vld [vmem:[%s4 + $0x178] sm:$0xff]
    %v544 = vld [vmem:[%s4 + $0x180] sm:$0xff]
    %v545 = vld [vmem:[%s4 + $0x188] sm:$0xff]
    %v546 = vld [vmem:[%s4 + $0x190] sm:$0xff]
    %v547 = vld [vmem:[%s4 + $0x198] sm:$0xff]
    %v548 = vld [vmem:[%s4 + $0x1a0] sm:$0xff]
    %v549 = vld [vmem:[%s4 + $0x1a8] sm:$0xff]
    %v550 = vld [vmem:[%s4 + $0x1b0] sm:$0xff]
    %v551 = vld [vmem:[%s4 + $0x1b8] sm:$0xff]
    %v552 = vld [vmem:[%s4 + $0x1c0] sm:$0xff]
    %v553 = vld [vmem:[%s4 + $0x1c8] sm:$0xff]
    %v554 = vld [vmem:[%s4 + $0x1d0] sm:$0xff]
    %v555 = vld [vmem:[%s4 + $0x1d8] sm:$0xff]
    %v556 = vld [vmem:[%s4 + $0x1e0] sm:$0xff]
    %v557 = vld [vmem:[%s4 + $0x1e8] sm:$0xff]
    %v558 = vld [vmem:[%s4 + $0x1f0] sm:$0xff]
    %v559 = vld [vmem:[%s4 + $0x1f8] sm:$0xff]
    %v560 = vld [vmem:[%s5] sm:$0x3]
    %v562 = vlaneseq
    %v563 = vshrl.u32 %v562, 7
    %v564 = vsub.s32 0, %v563
    %v565 = vrot.slane %v560, %v564
    %v566 = vlaneseq
    %v567 = vshrl.u32 %v566, 7
    %v568 = vsub.s32 1, %v567
    %v569 = vrot.slane %v560, %v568
    %572 = vmatprep.subr.mxu0 %v527
    %573 = vmatpush1.msra.mxu0 %v526
    %574 = vmatprep.subr.mxu0 %v525
    %575 = vmatpush1.msra.mxu0 %v524
    %576 = vmatprep.subr.mxu0 %v523
    %577 = vmatpush1.msra.mxu0 %v522
    %578 = vmatprep.subr.mxu0 %v521
    %579 = vmatpush1.msra.mxu0 %v520
    %580 = vmatprep.subr.mxu0 %v519
    %581 = vmatpush1.msra.mxu0 %v518
    %582 = vmatprep.subr.mxu0 %v517
    %583 = vmatpush1.msra.mxu0 %v516
    %584 = vmatprep.subr.mxu0 %v515
    %585 = vmatpush1.msra.mxu0 %v514
    %586 = vmatprep.subr.mxu0 %v513
    %587 = vmatpush1.msra.mxu0 %v512
    %588 = vmatprep.subr.mxu0 %v511
    %589 = vmatpush1.msra.mxu0 %v510
    %590 = vmatprep.subr.mxu0 %v509
    %591 = vmatpush1.msra.mxu0 %v508
    %592 = vmatprep.subr.mxu0 %v507
    %593 = vmatpush1.msra.mxu0 %v506
    %594 = vmatprep.subr.mxu0 %v505
    %595 = vmatpush1.msra.mxu0 %v504
    %596 = vmatprep.subr.mxu0 %v503
    %597 = vmatpush1.msra.mxu0 %v502
    %598 = vmatprep.subr.mxu0 %v501
    %599 = vmatpush1.msra.mxu0 %v500
    %600 = vmatprep.subr.mxu0 %v499
    %601 = vmatpush1.msra.mxu0 %v498
    %602 = vmatprep.subr.mxu0 %v497
    %603 = vmatpush1.msra.mxu0 %v496
    %604 = vmatprep.subr.mxu0 %v559
    %605 = vmatpush2.msra.mxu0 %v558
    %606 = vmatprep.subr.mxu0 %v557
    %607 = vmatpush2.msra.mxu0 %v556
    %608 = vmatprep.subr.mxu0 %v555
    %609 = vmatpush2.msra.mxu0 %v554
    %610 = vmatprep.subr.mxu0 %v553
    %611 = vmatpush2.msra.mxu0 %v552
    %612 = vmatprep.subr.mxu0 %v551
    %613 = vmatpush2.msra.mxu0 %v550
    %614 = vmatprep.subr.mxu0 %v549
    %615 = vmatpush2.msra.mxu0 %v548
    %616 = vmatprep.subr.mxu0 %v547
    %617 = vmatpush2.msra.mxu0 %v546
    %618 = vmatprep.subr.mxu0 %v545
    %619 = vmatpush2.msra.mxu0 %v544
    %620 = vmatprep.subr.mxu0 %v543
    %621 = vmatpush2.msra.mxu0 %v542
    %622 = vmatprep.subr.mxu0 %v541
    %623 = vmatpush2.msra.mxu0 %v540
    %624 = vmatprep.subr.mxu0 %v539
    %625 = vmatpush2.msra.mxu0 %v538
    %626 = vmatprep.subr.mxu0 %v537
    %627 = vmatpush2.msra.mxu0 %v536
    %628 = vmatprep.subr.mxu0 %v535
    %629 = vmatpush2.msra.mxu0 %v534
    %630 = vmatprep.subr.mxu0 %v533
    %631 = vmatpush2.msra.mxu0 %v532
    %632 = vmatprep.subr.mxu0 %v531
    %633 = vmatpush2.msra.mxu0 %v530
    %634 = vmatprep.subr.mxu0 %v529
    %635 = vmatpush2.msra.mxu0 %v528
    %636 = vmatprep.mubr.f32.mxu0 %v494
    %637 = vmatmul.mubr.f32.gmra.mxu0 %v492
    %v638 = vpop.f32.mrf.mxu0
    %v639 = vadd.f32 %v565, %v638
    %v640 = vpop.f32.mrf.mxu0
    %v641 = vadd.f32 %v569, %v640
    %642 = vdwg.mxu0
    %v645 = vcombine.low %v639, %v641
    %647 = vst [vmem:[#allocation2] sm:$0xff] %v645
    // Predicated region
    $region26: #{customnet_forward.1} parent=1 // pred_check
      _
    $region27: #{customnet_forward.1} parent=1 // pred_check_branch
      %649 = sbr.rel (0) target = $region29
    $region28: #{customnet_forward.1} parent=1 // pred_region
      %s651 = ssub.s32 128, 128
      %652 = vsyncadd [#allocation3], %s651
      %s654 = sshll.u32 [#allocation2], 4
      %s655 = int_to_ptr.vmem [resolvable:$true] %s654
      %657 = dma.vmem_to_hbm [thread:$0]  %s655, 128, %s6, [#allocation3]
    $region29: #{customnet_forward.1} parent=1 // pred_fallthru
      _
    // Predicated region
    $region30: #{customnet_forward.1} parent=1 // pred_check
      _
    $region31: #{customnet_forward.1} parent=1 // pred_check_branch
      %659 = sbr.rel (0) target = $region33
    $region32: #{customnet_forward.1} parent=1 // pred_region
      %660 = dma.done [#allocation3], 128
    $region33: #{customnet_forward.1} parent=1 // pred_fallthru
      _
    %661 = vsyncpa [#allocation3], 1

</llo_original>
